<compile_context>
chip_gen: v5e
topology: v5e:2x2
jax: 0.10.0
libtpu: 0.0.40
codegen_flags: <defaults>
</compile_context>

<pallas_src>
import functools

import jax
import jax.numpy as jnp
from jax.experimental import pallas as pl
from jax.experimental.pallas import tpu as pltpu


def _round_up(v, m):
    return (v + m - 1) // m * m


def _mlp_kernel(x_ref, w1_ref, b1_ref, w2_ref, b2_ref, w3_ref, b3_ref, o_ref):
    # Three MXU matmuls with f32 accumulation; bias add + ReLU on the VPU in f32.
    h = jnp.dot(x_ref[...], w1_ref[...], preferred_element_type=jnp.float32)
    h = jnp.maximum(h + b1_ref[...], 0.0)
    h = jnp.dot(h.astype(w2_ref.dtype), w2_ref[...],
                preferred_element_type=jnp.float32)
    h = jnp.maximum(h + b2_ref[...], 0.0)
    o = jnp.dot(h.astype(w3_ref.dtype), w3_ref[...],
                preferred_element_type=jnp.float32) + b3_ref[...]
    o_ref[...] = o.astype(o_ref.dtype)


@functools.partial(jax.jit, static_argnames=("tile_rows", "compute_dtype"))
def mlp_forward(x, w1, b1, w2, b2, w3, b3, *, tile_rows=512, compute_dtype=None):
    """x: (..., d_in). Weights are (in, out); biases (1, out) — same math as torch Linear."""
    orig_shape = x.shape
    d_in, d_hid, d_out = w1.shape[0], w1.shape[1], w3.shape[1]
    x2d = x.reshape(-1, d_in)
    n = x2d.shape[0]
    out_dtype = x.dtype

    cdt = jnp.dtype(out_dtype if compute_dtype is None else compute_dtype)

    # Lane-dense padding: feature axes up to multiples of 128 (full vreg lanes,
    # unmasked output stores); rows up to a multiple of the row tile.
    d_in_p = _round_up(d_in, 128)
    d_hid_p = _round_up(d_hid, 128)
    d_out_p = _round_up(d_out, 128)

    num_tiles = max(1, -(-n // tile_rows))        # cdiv
    tm = _round_up(-(-n // num_tiles), 8)         # rows per grid step (mult. of 8)
    n_p = tm * num_tiles

    def pad_to(a, rows, cols, dtype):
        a = a.astype(dtype)
        return jnp.pad(a, ((0, rows - a.shape[0]), (0, cols - a.shape[1])))

    x_p = pad_to(x2d, n_p, d_in_p, cdt)
    w1_p = pad_to(w1, d_in_p, d_hid_p, cdt)
    w2_p = pad_to(w2, d_hid_p, d_hid_p, cdt)
    w3_p = pad_to(w3, d_hid_p, d_out_p, cdt)
    b1_p = pad_to(b1, 1, d_hid_p, jnp.float32)
    b2_p = pad_to(b2, 1, d_hid_p, jnp.float32)
    b3_p = pad_to(b3, 1, d_out_p, jnp.float32)

    rows = lambda i: (i, 0)   # row-tiled arrays
    full = lambda i: (0, 0)   # weights/biases: constant block index -> fetched once

    itemsize = jnp.dtype(cdt).itemsize
    flops = 2 * n_p * (d_in_p * d_hid_p + d_hid_p * d_hid_p + d_hid_p * d_out_p)
    bytes_accessed = (
        n_p * d_in_p * itemsize
        + (d_in_p * d_hid_p + d_hid_p * d_hid_p + d_hid_p * d_out_p) * itemsize
        + (2 * d_hid_p + d_out_p) * 4
        + n_p * d_out_p * jnp.dtype(out_dtype).itemsize
    )

    out = pl.pallas_call(
        _mlp_kernel,
        out_shape=jax.ShapeDtypeStruct((n_p, d_out_p), out_dtype),
        grid_spec=pltpu.PrefetchScalarGridSpec(
            num_scalar_prefetch=0,
            grid=(num_tiles,),
            in_specs=[
                pl.BlockSpec((tm, d_in_p), rows),
                pl.BlockSpec((d_in_p, d_hid_p), full),
                pl.BlockSpec((1, d_hid_p), full),
                pl.BlockSpec((d_hid_p, d_hid_p), full),
                pl.BlockSpec((1, d_hid_p), full),
                pl.BlockSpec((d_hid_p, d_out_p), full),
                pl.BlockSpec((1, d_out_p), full),
            ],
            out_specs=pl.BlockSpec((tm, d_out_p), rows),
        ),
        compiler_params=pltpu.CompilerParams(
            dimension_semantics=("parallel",)),
        cost_estimate=pl.CostEstimate(
            flops=flops, transcendentals=0, bytes_accessed=bytes_accessed),
    )(x_p, w1_p, b1_p, w2_p, b2_p, w3_p, b3_p)

    out = out[:n, :d_out]
    return out.reshape(*orig_shape[:-1], d_out)


def init_mlp_params(key, input_dim, hidden_dim, output_dim, num_layers=3,
                    dtype=jnp.float32):
    """Deterministic synthetic init. Weights already transposed to (in, out) so the
    kernel does x @ W + b (same math as torch Linear's x @ W.T + b, W=(out,in))."""
    assert num_layers == 3, "this kernel is specialized for num_layers=3"
    dims = [input_dim, hidden_dim, hidden_dim, output_dim]
    params = []
    for i in range(num_layers):
        key, kw, kb = jax.random.split(key, 3)
        fan_in, fan_out = dims[i], dims[i + 1]
        bound = 1.0 / (fan_in ** 0.5)   # matches torch.nn.Linear default range
        w = jax.random.uniform(kw, (fan_in, fan_out), dtype, -bound, bound)
        b = jax.random.uniform(kb, (1, fan_out), dtype, -bound, bound)
        params += [w, b]
    return tuple(params)


def mlp_reference(x, w1, b1, w2, b2, w3, b3):
    h = jax.nn.relu(x @ w1 + b1[0])
    h = jax.nn.relu(h @ w2 + b2[0])
    return h @ w3 + b3[0]


if __name__ == "__main__":
    key = jax.random.PRNGKey(0)

    # --- small demo shape (Deformable-DETR bbox head, MLP(hidden, hidden, 5, 3)) ---
    batch, queries = 2, 8
    input_dim = hidden_dim = 32
    output_dim = 5

    key, kx = jax.random.split(key)
    x = jax.random.normal(kx, (batch, queries, input_dim), dtype=jnp.float32)
    params = init_mlp_params(key, input_dim, hidden_dim, output_dim)

    y = jax.block_until_ready(mlp_forward(x, *params))
    y_ref = mlp_reference(x, *params)
    assert y.shape == (batch, queries, output_dim)
    assert jnp.allclose(y, y_ref, atol=1e-4, rtol=1e-4), "mismatch vs reference (small)"

    # --- realistic DETR shape: exercises multi-tile grid + row padding + bf16 path ---
    batch2, queries2, d_model = 2, 300, 256
    key, kx2, kp2 = jax.random.split(key, 3)
    x2 = jax.random.normal(kx2, (batch2, queries2, d_model), dtype=jnp.float32)
    params2 = init_mlp_params(kp2, d_model, d_model, output_dim)

    y2 = jax.block_until_ready(mlp_forward(x2, *params2))
    y2_ref = mlp_reference(x2, *params2)
    assert y2.shape == (batch2, queries2, output_dim)
    assert jnp.allclose(y2, y2_ref, atol=2e-2, rtol=2e-2), "mismatch vs reference (large)"

    # bf16 weights/activations with f32 accumulation (v6e/v7x-friendly path).
    y2_bf16 = jax.block_until_ready(
        mlp_forward(x2, *params2, compute_dtype=jnp.bfloat16))
    assert jnp.allclose(y2_bf16, y2_ref, atol=5e-2, rtol=5e-2), "bf16 path mismatch"

    print("KERNEL_OK")
</pallas_src>

<mosaic_0001>
module attributes {stable_mosaic.version = 11 : i64} {
  func.func @_mlp_kernel(%arg0: i32, %arg1: memref<16x128xf32, #tpu.memory_space<vmem>>, %arg2: memref<128x128xf32, #tpu.memory_space<vmem>>, %arg3: memref<1x128xf32, #tpu.memory_space<vmem>>, %arg4: memref<128x128xf32, #tpu.memory_space<vmem>>, %arg5: memref<1x128xf32, #tpu.memory_space<vmem>>, %arg6: memref<128x128xf32, #tpu.memory_space<vmem>>, %arg7: memref<1x128xf32, #tpu.memory_space<vmem>>, %arg8: memref<16x128xf32, #tpu.memory_space<vmem>>) attributes {dimension_semantics = [#tpu.dimension_semantics<parallel>], iteration_bounds = array<i64: 1>, scalar_prefetch = 0 : i64, scratch_operands = 0 : i64, tpu.core_type = #tpu.core_type<tc>, window_params = [{transform_indices = @transform_0, window_bounds = array<i64: 16, 128>}, {pipeline_mode = #tpu.pipeline_mode<synchronous>, transform_indices = @transform_1, window_bounds = array<i64: 128, 128>}, {pipeline_mode = #tpu.pipeline_mode<synchronous>, transform_indices = @transform_2, window_bounds = array<i64: 1, 128>}, {pipeline_mode = #tpu.pipeline_mode<synchronous>, transform_indices = @transform_3, window_bounds = array<i64: 128, 128>}, {pipeline_mode = #tpu.pipeline_mode<synchronous>, transform_indices = @transform_4, window_bounds = array<i64: 1, 128>}, {pipeline_mode = #tpu.pipeline_mode<synchronous>, transform_indices = @transform_5, window_bounds = array<i64: 128, 128>}, {pipeline_mode = #tpu.pipeline_mode<synchronous>, transform_indices = @transform_6, window_bounds = array<i64: 1, 128>}, {transform_indices = @transform_7, window_bounds = array<i64: 16, 128>}]} {
    %c0 = arith.constant 0 : index
    %c0_0 = arith.constant 0 : index
    %0 = vector.load %arg1[%c0, %c0_0] : memref<16x128xf32, #tpu.memory_space<vmem>>, vector<16x128xf32>
    %c0_1 = arith.constant 0 : index
    %c0_2 = arith.constant 0 : index
    %1 = vector.load %arg2[%c0_1, %c0_2] : memref<128x128xf32, #tpu.memory_space<vmem>>, vector<128x128xf32>
    %cst = arith.constant dense<0.000000e+00> : vector<16x128xf32>
    %2 = tpu.matmul %0, %1, %cst {dimension_numbers = #tpu.dot_dimension_numbers<[1], [0], [0], [1], [0, 0, 1, 1], [], []>} : vector<16x128xf32>, vector<128x128xf32>, vector<16x128xf32> -> vector<16x128xf32>
    %c0_3 = arith.constant 0 : index
    %c0_4 = arith.constant 0 : index
    %3 = vector.load %arg3[%c0_3, %c0_4] : memref<1x128xf32, #tpu.memory_space<vmem>>, vector<1x128xf32>
    %4 = vector.broadcast %3 : vector<1x128xf32> to vector<16x128xf32>
    %5 = arith.addf %2, %4 : vector<16x128xf32>
    %cst_5 = arith.constant 0.000000e+00 : f32
    %6 = vector.broadcast %cst_5 : f32 to vector<16x128xf32>
    %7 = arith.maximumf %5, %6 : vector<16x128xf32>
    %c0_6 = arith.constant 0 : index
    %c0_7 = arith.constant 0 : index
    %8 = vector.load %arg4[%c0_6, %c0_7] : memref<128x128xf32, #tpu.memory_space<vmem>>, vector<128x128xf32>
    %cst_8 = arith.constant dense<0.000000e+00> : vector<16x128xf32>
    %9 = tpu.matmul %7, %8, %cst_8 {dimension_numbers = #tpu.dot_dimension_numbers<[1], [0], [0], [1], [0, 0, 1, 1], [], []>} : vector<16x128xf32>, vector<128x128xf32>, vector<16x128xf32> -> vector<16x128xf32>
    %c0_9 = arith.constant 0 : index
    %c0_10 = arith.constant 0 : index
    %10 = vector.load %arg5[%c0_9, %c0_10] : memref<1x128xf32, #tpu.memory_space<vmem>>, vector<1x128xf32>
    %11 = vector.broadcast %10 : vector<1x128xf32> to vector<16x128xf32>
    %12 = arith.addf %9, %11 : vector<16x128xf32>
    %cst_11 = arith.constant 0.000000e+00 : f32
    %13 = vector.broadcast %cst_11 : f32 to vector<16x128xf32>
    %14 = arith.maximumf %12, %13 : vector<16x128xf32>
    %c0_12 = arith.constant 0 : index
    %c0_13 = arith.constant 0 : index
    %15 = vector.load %arg6[%c0_12, %c0_13] : memref<128x128xf32, #tpu.memory_space<vmem>>, vector<128x128xf32>
    %cst_14 = arith.constant dense<0.000000e+00> : vector<16x128xf32>
    %16 = tpu.matmul %14, %15, %cst_14 {dimension_numbers = #tpu.dot_dimension_numbers<[1], [0], [0], [1], [0, 0, 1, 1], [], []>} : vector<16x128xf32>, vector<128x128xf32>, vector<16x128xf32> -> vector<16x128xf32>
    %c0_15 = arith.constant 0 : index
    %c0_16 = arith.constant 0 : index
    %17 = vector.load %arg7[%c0_15, %c0_16] : memref<1x128xf32, #tpu.memory_space<vmem>>, vector<1x128xf32>
    %18 = vector.broadcast %17 : vector<1x128xf32> to vector<16x128xf32>
    %19 = arith.addf %16, %18 : vector<16x128xf32>
    %c0_17 = arith.constant 0 : index
    %c0_18 = arith.constant 0 : index
    %20 = vector.load %arg8[%c0_17, %c0_18] : memref<16x128xf32, #tpu.memory_space<vmem>>, vector<16x128xf32>
    tpu.vector_store %arg8[%c0_17, %c0_18], %19 {strides = array<i32>} : memref<16x128xf32, #tpu.memory_space<vmem>>, vector<16x128xf32>,
    return
  }
  func.func @transform_0(%arg0: i32) -> (i32, i32) {
    %c0_i32 = arith.constant 0 : i32
    %c0_i32_0 = arith.constant 0 : i32
    return %arg0, %c0_i32 : i32, i32
  }
  func.func @transform_1(%arg0: i32) -> (i32, i32) {
    %c0_i32 = arith.constant 0 : i32
    %c0_i32_0 = arith.constant 0 : i32
    %c0_i32_1 = arith.constant 0 : i32
    return %c0_i32, %c0_i32_0 : i32, i32
  }
  func.func @transform_2(%arg0: i32) -> (i32, i32) {
    %c0_i32 = arith.constant 0 : i32
    %c0_i32_0 = arith.constant 0 : i32
    %c0_i32_1 = arith.constant 0 : i32
    return %c0_i32, %c0_i32_0 : i32, i32
  }
  func.func @transform_3(%arg0: i32) -> (i32, i32) {
    %c0_i32 = arith.constant 0 : i32
    %c0_i32_0 = arith.constant 0 : i32
    %c0_i32_1 = arith.constant 0 : i32
    return %c0_i32, %c0_i32_0 : i32, i32
  }
  func.func @transform_4(%arg0: i32) -> (i32, i32) {
    %c0_i32 = arith.constant 0 : i32
    %c0_i32_0 = arith.constant 0 : i32
    %c0_i32_1 = arith.constant 0 : i32
    return %c0_i32, %c0_i32_0 : i32, i32
  }
  func.func @transform_5(%arg0: i32) -> (i32, i32) {
    %c0_i32 = arith.constant 0 : i32
    %c0_i32_0 = arith.constant 0 : i32
    %c0_i32_1 = arith.constant 0 : i32
    return %c0_i32, %c0_i32_0 : i32, i32
  }
  func.func @transform_6(%arg0: i32) -> (i32, i32) {
    %c0_i32 = arith.constant 0 : i32
    %c0_i32_0 = arith.constant 0 : i32
    %c0_i32_1 = arith.constant 0 : i32
    return %c0_i32, %c0_i32_0 : i32, i32
  }
  func.func @transform_7(%arg0: i32) -> (i32, i32) {
    %c0_i32 = arith.constant 0 : i32
    %c0_i32_0 = arith.constant 0 : i32
    return %arg0, %c0_i32 : i32, i32
  }
}

</mosaic_0001>

<llo_original>
// kernel: mlp_forward.1
$region0: #{mlp_forward.1}
  #allocation0 [shape = 'u32[]', space=smem, size = 0x4, offset = 0x4, fixed_abs, tag = 'smem constant byte address 0x4 - core index']
  #allocation1 [shape = 'u32[72,128]{1,0:T(1,128)}', space=vmem, size = 0x9000, scoped, tag = 'internal scratch']
  %s0 = inlined_call_operand.vmem [shape: f32[16,128], index: 0, kind: input, shape index: {}]
  %s1 = inlined_call_operand.vmem [shape: f32[128,128], index: 1, kind: input, shape index: {}]
  %s2 = inlined_call_operand.vmem [shape: f32[1,128], index: 2, kind: input, shape index: {}]
  %s3 = inlined_call_operand.vmem [shape: f32[128,128], index: 3, kind: input, shape index: {}]
  %s4 = inlined_call_operand.vmem [shape: f32[1,128], index: 4, kind: input, shape index: {}]
  %s5 = inlined_call_operand.vmem [shape: f32[128,128], index: 5, kind: input, shape index: {}]
  %s6 = inlined_call_operand.vmem [shape: f32[1,128], index: 6, kind: input, shape index: {}]
  %s7 = inlined_call_operand.vmem [shape: f32[16,128], index: 7, kind: output, shape index: {}]
  %s8 = sld [smem:[#allocation0]]
  $region38: #{mlp_forward.1} parent=0
    _
  %s10 = ssub.s32 1, %s8
  %s11 = scalar_select 0, %s10, %s8
  // Predicated region
  $region2: #{mlp_forward.1} parent=0 // pred_check
    _
  $region3: #{mlp_forward.1} parent=0 // pred_check_branch
    %13 = sbr.rel (0) target = $region5
  $region4: #{mlp_forward.1} parent=0 // pred_region
    _
  $region5: #{mlp_forward.1} parent=0 // pred_fallthru
    _
  // Predicated region
  $region6: #{mlp_forward.1} parent=0 // pred_check
    _
  $region7: #{mlp_forward.1} parent=0 // pred_check_branch
    %15 = sbr.rel (0) target = $region9
  $region8: #{mlp_forward.1} parent=0 // pred_region
    _
  $region9: #{mlp_forward.1} parent=0 // pred_fallthru
    _
  // Predicated region
  $region10: #{mlp_forward.1} parent=0 // pred_check
    _
  $region11: #{mlp_forward.1} parent=0 // pred_check_branch
    %17 = sbr.rel (0) target = $region13
  $region12: #{mlp_forward.1} parent=0 // pred_region
    _
  $region13: #{mlp_forward.1} parent=0 // pred_fallthru
    _
  // Predicated region
  $region14: #{mlp_forward.1} parent=0 // pred_check
    _
  $region15: #{mlp_forward.1} parent=0 // pred_check_branch
    %19 = sbr.rel (0) target = $region17
  $region16: #{mlp_forward.1} parent=0 // pred_region
    _
  $region17: #{mlp_forward.1} parent=0 // pred_fallthru
    _
  // Predicated region
  $region18: #{mlp_forward.1} parent=0 // pred_check
    _
  $region19: #{mlp_forward.1} parent=0 // pred_check_branch
    %21 = sbr.rel (0) target = $region21
  $region20: #{mlp_forward.1} parent=0 // pred_region
    _
  $region21: #{mlp_forward.1} parent=0 // pred_fallthru
    _
  // Predicated region
  $region22: #{mlp_forward.1} parent=0 // pred_check
    _
  $region23: #{mlp_forward.1} parent=0 // pred_check_branch
    %23 = sbr.rel (0) target = $region25
  $region24: #{mlp_forward.1} parent=0 // pred_region
    _
  $region25: #{mlp_forward.1} parent=0 // pred_fallthru
    _
  // Predicated region
  $region26: #{mlp_forward.1} parent=0 // pred_check
    _
  $region27: #{mlp_forward.1} parent=0 // pred_check_branch
    %25 = sbr.rel (0) target = $region29
  $region28: #{mlp_forward.1} parent=0 // pred_region
    _
  $region29: #{mlp_forward.1} parent=0 // pred_fallthru
    _
  %v26 = vld [vmem:[%s0] sm:$0xff]
  %v27 = vld [vmem:[%s0 + $0x8] sm:$0xff]
  %v28 = vld [vmem:[%s1] sm:$0xff]
  %v29 = vld [vmem:[%s1 + $0x8] sm:$0xff]
  %v30 = vld [vmem:[%s1 + $0x10] sm:$0xff]
  %v31 = vld [vmem:[%s1 + $0x18] sm:$0xff]
  %v32 = vld [vmem:[%s1 + $0x20] sm:$0xff]
  %v33 = vld [vmem:[%s1 + $0x28] sm:$0xff]
  %v34 = vld [vmem:[%s1 + $0x30] sm:$0xff]
  %v35 = vld [vmem:[%s1 + $0x38] sm:$0xff]
  %v36 = vld [vmem:[%s1 + $0x40] sm:$0xff]
  %v37 = vld [vmem:[%s1 + $0x48] sm:$0xff]
  %v38 = vld [vmem:[%s1 + $0x50] sm:$0xff]
  %v39 = vld [vmem:[%s1 + $0x58] sm:$0xff]
  %v40 = vld [vmem:[%s1 + $0x60] sm:$0xff]
  %v41 = vld [vmem:[%s1 + $0x68] sm:$0xff]
  %v42 = vld [vmem:[%s1 + $0x70] sm:$0xff]
  %v43 = vld [vmem:[%s1 + $0x78] sm:$0xff]
  %v44 = vld [vmem:[%s2] sm:$0x1]
  %v46 = vperm.slane %v44, 0
  %48 = vmatpush.msra.mxu0 %v43
  %49 = vmatpush.msra.mxu0 %v42
  %50 = vmatpush.msra.mxu0 %v41
  %51 = vmatpush.msra.mxu0 %v40
  %52 = vmatpush.msra.mxu0 %v39
  %53 = vmatpush.msra.mxu0 %v38
  %54 = vmatpush.msra.mxu0 %v37
  %55 = vmatpush.msra.mxu0 %v36
  %56 = vmatpush.msra.mxu0 %v35
  %57 = vmatpush.msra.mxu0 %v34
  %58 = vmatpush.msra.mxu0 %v33
  %59 = vmatpush.msra.mxu0 %v32
  %60 = vmatpush.msra.mxu0 %v31
  %61 = vmatpush.msra.mxu0 %v30
  %62 = vmatpush.msra.mxu0 %v29
  %63 = vmatpush.msra.mxu0 %v28
  %64 = vmatmul.f32.gmra.mxu0 %v26
  %v65 = vpop.f32.mrf.mxu0
  %v66 = vadd.f32 %v46, %v65
  %67 = vmatmul.f32.gmra.mxu0 %v27
  %v68 = vpop.f32.mrf.mxu0
  %v69 = vadd.f32 %v46, %v68
  %70 = vdwg.mxu0
  %v71 = vmax.f32 %v66, 0.0
  %v72 = vmax.f32 %v69, 0.0
  %v73 = vld [vmem:[%s3] sm:$0xff]
  %v74 = vld [vmem:[%s3 + $0x8] sm:$0xff]
  %v75 = vld [vmem:[%s3 + $0x10] sm:$0xff]
  %v76 = vld [vmem:[%s3 + $0x18] sm:$0xff]
  %v77 = vld [vmem:[%s3 + $0x20] sm:$0xff]
  %v78 = vld [vmem:[%s3 + $0x28] sm:$0xff]
  %v79 = vld [vmem:[%s3 + $0x30] sm:$0xff]
  %v80 = vld [vmem:[%s3 + $0x38] sm:$0xff]
  %v81 = vld [vmem:[%s3 + $0x40] sm:$0xff]
  %v82 = vld [vmem:[%s3 + $0x48] sm:$0xff]
  %v83 = vld [vmem:[%s3 + $0x50] sm:$0xff]
  %v84 = vld [vmem:[%s3 + $0x58] sm:$0xff]
  %v85 = vld [vmem:[%s3 + $0x60] sm:$0xff]
  %v86 = vld [vmem:[%s3 + $0x68] sm:$0xff]
  %v87 = vld [vmem:[%s3 + $0x70] sm:$0xff]
  %v88 = vld [vmem:[%s3 + $0x78] sm:$0xff]
  %v89 = vld [vmem:[%s4] sm:$0x1]
  %v91 = vperm.slane %v89, 0
  %93 = vmatpush.msra.mxu0 %v88
  %94 = vmatpush.msra.mxu0 %v87
  %95 = vmatpush.msra.mxu0 %v86
  %96 = vmatpush.msra.mxu0 %v85
  %97 = vmatpush.msra.mxu0 %v84
  %98 = vmatpush.msra.mxu0 %v83
  %99 = vmatpush.msra.mxu0 %v82
  %100 = vmatpush.msra.mxu0 %v81
  %101 = vmatpush.msra.mxu0 %v80
  %102 = vmatpush.msra.mxu0 %v79
  %103 = vmatpush.msra.mxu0 %v78
  %104 = vmatpush.msra.mxu0 %v77
  %105 = vmatpush.msra.mxu0 %v76
  %106 = vmatpush.msra.mxu0 %v75
  %107 = vmatpush.msra.mxu0 %v74
  %108 = vmatpush.msra.mxu0 %v73
  %109 = vmatmul.f32.gmra.mxu0 %v71
  %v110 = vpop.f32.mrf.mxu0
  %v111 = vadd.f32 %v91, %v110
  %112 = vmatmul.f32.gmra.mxu0 %v72
  %v113 = vpop.f32.mrf.mxu0
  %v114 = vadd.f32 %v91, %v113
  %115 = vdwg.mxu0
  %v116 = vmax.f32 %v111, 0.0
  %v117 = vmax.f32 %v114, 0.0
  %v118 = vld [vmem:[%s5] sm:$0xff]
  %v119 = vld [vmem:[%s5 + $0x8] sm:$0xff]
  %v120 = vld [vmem:[%s5 + $0x10] sm:$0xff]
  %v121 = vld [vmem:[%s5 + $0x18] sm:$0xff]
  %v122 = vld [vmem:[%s5 + $0x20] sm:$0xff]
  %v123 = vld [vmem:[%s5 + $0x28] sm:$0xff]
  %v124 = vld [vmem:[%s5 + $0x30] sm:$0xff]
  %v125 = vld [vmem:[%s5 + $0x38] sm:$0xff]
  %v126 = vld [vmem:[%s5 + $0x40] sm:$0xff]
  %v127 = vld [vmem:[%s5 + $0x48] sm:$0xff]
  %v128 = vld [vmem:[%s5 + $0x50] sm:$0xff]
  %v129 = vld [vmem:[%s5 + $0x58] sm:$0xff]
  %v130 = vld [vmem:[%s5 + $0x60] sm:$0xff]
  %v131 = vld [vmem:[%s5 + $0x68] sm:$0xff]
  %v132 = vld [vmem:[%s5 + $0x70] sm:$0xff]
  %v133 = vld [vmem:[%s5 + $0x78] sm:$0xff]
  %v134 = vld [vmem:[%s6] sm:$0x1]
  %v136 = vperm.slane %v134, 0
  %138 = vmatpush.msra.mxu0 %v133
  %139 = vmatpush.msra.mxu0 %v132
  %140 = vmatpush.msra.mxu0 %v131
  %141 = vmatpush.msra.mxu0 %v130
  %142 = vmatpush.msra.mxu0 %v129
  %143 = vmatpush.msra.mxu0 %v128
  %144 = vmatpush.msra.mxu0 %v127
  %145 = vmatpush.msra.mxu0 %v126
  %146 = vmatpush.msra.mxu0 %v125
  %147 = vmatpush.msra.mxu0 %v124
  %148 = vmatpush.msra.mxu0 %v123
  %149 = vmatpush.msra.mxu0 %v122
  %150 = vmatpush.msra.mxu0 %v121
  %151 = vmatpush.msra.mxu0 %v120
  %152 = vmatpush.msra.mxu0 %v119
  %153 = vmatpush.msra.mxu0 %v118
  %154 = vmatmul.f32.gmra.mxu0 %v116
  %v155 = vpop.f32.mrf.mxu0
  %v156 = vadd.f32 %v136, %v155
  %157 = vmatmul.f32.gmra.mxu0 %v117
  %v158 = vpop.f32.mrf.mxu0
  %v159 = vadd.f32 %v136, %v158
  %160 = vdwg.mxu0
  %161 = vst [vmem:[%s7] sm:$0xff] %v156
  %162 = vst [vmem:[%s7 + $0x8] sm:$0xff] %v159
  // Predicated region
  $region30: #{mlp_forward.1} parent=0 // pred_check
    _
  $region31: #{mlp_forward.1} parent=0 // pred_check_branch
    %164 = sbr.rel (0) target = $region33
  $region32: #{mlp_forward.1} parent=0 // pred_region
    _
  $region33: #{mlp_forward.1} parent=0 // pred_fallthru
    _
  // Predicated region
  $region34: #{mlp_forward.1} parent=0 // pred_check
    _
  $region35: #{mlp_forward.1} parent=0 // pred_check_branch
    %166 = sbr.rel (0) target = $region37
  $region36: #{mlp_forward.1} parent=0 // pred_region
    _
  $region37: #{mlp_forward.1} parent=0 // pred_fallthru
    _

</llo_original>
